<compile_context>
chip_gen: v7x
topology: tpu7x:2x2x1
jax: 0.10.0
libtpu: 0.0.40
codegen_flags: <defaults>
</compile_context>

<pallas_src>
import math
from functools import partial

import jax
import jax.numpy as jnp
from jax.experimental import pallas as pl
from jax.experimental.pallas import tpu as pltpu


def _linear_kernel(x_ref, w_ref, b_ref, o_ref, acc_ref):
    """One (tm, tn) output tile of Y = X @ W + b, K-tiled with f32 accumulator."""
    k = pl.program_id(2)

    @pl.when(k == 0)
    def _init():
        acc_ref[...] = jnp.zeros_like(acc_ref)

    acc_ref[...] += jnp.dot(
        x_ref[...], w_ref[...], preferred_element_type=jnp.float32
    )

    @pl.when(k == pl.num_programs(2) - 1)
    def _finalize():
        o_ref[...] = (acc_ref[...] + b_ref[...].astype(jnp.float32)).astype(o_ref.dtype)


def _round_up(x, m):
    return (x + m - 1) // m * m


def _pick_tk(d_model, tk_max=512):
    """Largest K tile that divides d_model (keeps the reduction garbage-free)."""
    if d_model <= tk_max:
        return d_model
    top = tk_max - (tk_max % 128)
    for cand in range(top, 0, -128):
        if d_model % cand == 0:
            return cand
    # No clean multiple-of-128 divisor: keep K untiled (handled by vmem_limit).
    return d_model


def numerical_out(input_data, W, b, *, compute_dtype=None, tm_max=512, tn_max=256):
    """NumericalOut.forward: Linear(d_model -> in_features) over the last axis.

    input_data : (..., d_model)
    W          : (d_model, in_features)  -- transposed copy of nn.Linear.weight
    b          : (1, in_features)
    """
    lead = input_data.shape[:-1]
    d_model = input_data.shape[-1]
    in_features = W.shape[1]
    out_dtype = input_data.dtype

    # Fold all leading axes into one M dimension (big MXU row tiles).
    M = int(math.prod(lead)) if lead else 1
    x2 = input_data.reshape(M, d_model)

    # Optional low-precision streaming of the two matmul operands (f32 accum).
    if compute_dtype is not None and x2.dtype != compute_dtype:
        x2 = x2.astype(compute_dtype)
        W = W.astype(compute_dtype)

    # Packed-sublane minimum for the activation dtype: 8 (f32) / 16 (bf16) / 32 (i8).
    itemsize = jnp.dtype(x2.dtype).itemsize
    min_sublane = (4 // itemsize) * 8

    # --- tile selection --------------------------------------------------
    tm = min(tm_max, _round_up(M, min_sublane))
    tk = _pick_tk(d_model)

    if in_features <= 512:
        # Full last dim in one block: tiny store stream, masked stores are fine,
        # and no pad / slice HBM passes.
        tn = in_features
        Np = in_features
    else:
        tn = tn_max
        Np = _round_up(in_features, tn)
        if Np != in_features:
            # Static params: in production pre-pad once at parameter-load time.
            W = jnp.pad(W, ((0, 0), (0, Np - in_features)))
            b = jnp.pad(b, ((0, 0), (0, Np - in_features)))

    grid = (pl.cdiv(M, tm), Np // tn, d_model // tk)

    # --- VMEM budget / compiler params ------------------------------------
    wb = jnp.dtype(W.dtype).itemsize
    bb = jnp.dtype(b.dtype).itemsize
    ob = jnp.dtype(out_dtype).itemsize
    vmem_est = 2 * (tm * tk * itemsize + tk * tn * wb + tn * bb + tm * tn * ob) \
        + tm * tn * 4
    vmem_limit = None
    if vmem_est > 12 * 1024 * 1024:
        vmem_limit = min(100 * 1024 * 1024, 2 * vmem_est)

    cost = pl.CostEstimate(
        flops=2 * M * d_model * in_features,
        transcendentals=0,
        bytes_accessed=(M * d_model * itemsize
                        + d_model * Np * wb
                        + Np * bb
                        + M * Np * ob),
    )

    out = pl.pallas_call(
        _linear_kernel,
        out_shape=jax.ShapeDtypeStruct((M, Np), out_dtype),
        grid_spec=pltpu.PrefetchScalarGridSpec(
            num_scalar_prefetch=0,
            grid=grid,
            in_specs=[
                pl.BlockSpec((tm, tk), lambda i, j, k: (i, k)),   # activations
                pl.BlockSpec((tk, tn), lambda i, j, k: (k, j)),   # weight
                pl.BlockSpec((1, tn), lambda i, j, k: (0, j)),    # bias
            ],
            out_specs=pl.BlockSpec((tm, tn), lambda i, j, k: (i, j)),
            scratch_shapes=[pltpu.VMEM((tm, tn), jnp.float32)],
        ),
        compiler_params=pltpu.CompilerParams(
            dimension_semantics=("parallel", "parallel", "arbitrary"),
            vmem_limit_bytes=vmem_limit,
        ),
        cost_estimate=cost,
    )(x2, W, b)

    if Np != in_features:
        out = out[:, :in_features]
    return out.reshape(*lead, in_features)


def _reference(input_data, W, b):
    return input_data @ W + b[0]


if __name__ == "__main__":
    # Small config implied by ParameterProvider: d_model, in_features.
    B, L = 2, 8
    d_model, in_features = 32, 16

    key = jax.random.PRNGKey(0)
    k_w, k_b, k_x = jax.random.split(key, 3)

    # nn.Linear-style uniform init; weight kept transposed as (d_model, in_features).
    bound = 1.0 / math.sqrt(d_model)
    W = jax.random.uniform(k_w, (d_model, in_features), jnp.float32, -bound, bound)
    b = jax.random.uniform(k_b, (1, in_features), jnp.float32, -bound, bound)

    input_data = jax.random.normal(k_x, (B, L, d_model), jnp.float32)

    ref = _reference(input_data, W, b)

    # f32 path (exact).
    fwd = jax.jit(partial(numerical_out))
    out = jax.block_until_ready(fwd(input_data, W, b))
    assert out.shape == (B, L, in_features)
    assert jnp.allclose(out, ref, atol=1e-5, rtol=1e-5)

    # bf16 streaming path (f32 accumulation) — loose tolerance.
    fwd_bf16 = jax.jit(partial(numerical_out, compute_dtype=jnp.bfloat16))
    out_bf16 = jax.block_until_ready(fwd_bf16(input_data, W, b))
    assert out_bf16.shape == (B, L, in_features)
    assert jnp.allclose(out_bf16, ref, atol=3e-2, rtol=3e-2)

    print("KERNEL_OK")
</pallas_src>

<mosaic_0001>
module attributes {stable_mosaic.version = 11 : i64} {
  func.func @_linear_kernel(%arg0: i32, %arg1: i32, %arg2: i32, %arg3: memref<16x32xf32, #tpu.memory_space<vmem>>, %arg4: memref<32x16xf32, #tpu.memory_space<vmem>>, %arg5: memref<1x16xf32, #tpu.memory_space<vmem>>, %arg6: memref<16x16xf32, #tpu.memory_space<vmem>>, %arg7: memref<16x16xf32, #tpu.memory_space<vmem>>) attributes {dimension_semantics = [#tpu.dimension_semantics<parallel>, #tpu.dimension_semantics<parallel>, #tpu.dimension_semantics<arbitrary>], iteration_bounds = array<i64: 1, 1, 1>, scalar_prefetch = 0 : i64, scratch_operands = 1 : i64, tpu.core_type = #tpu.core_type<tc>, window_params = [{transform_indices = @transform_0, window_bounds = array<i64: 16, 32>}, {transform_indices = @transform_1, window_bounds = array<i64: 32, 16>}, {transform_indices = @transform_2, window_bounds = array<i64: 1, 16>}, {transform_indices = @transform_3, window_bounds = array<i64: 16, 16>}]} {
    %c0_i32 = arith.constant 0 : i32
    %0 = arith.cmpi eq, %arg2, %c0_i32 : i32
    %1 = arith.extui %0 : i1 to i32
    %c0_i32_0 = arith.constant 0 : i32
    %2 = arith.cmpi ne, %1, %c0_i32_0 : i32
    scf.if %2 {
      %cst_10 = arith.constant 0.000000e+00 : f32
      %12 = vector.broadcast %cst_10 : f32 to vector<16x16xf32>
      %c0_11 = arith.constant 0 : index
      %c0_12 = arith.constant 0 : index
      %13 = vector.load %arg7[%c0_11, %c0_12] : memref<16x16xf32, #tpu.memory_space<vmem>>, vector<16x16xf32>
      tpu.vector_store %arg7[%c0_11, %c0_12], %12 {strides = array<i32>} : memref<16x16xf32, #tpu.memory_space<vmem>>, vector<16x16xf32>,
    } else {
    }
    %c0 = arith.constant 0 : index
    %c0_1 = arith.constant 0 : index
    %3 = vector.load %arg7[%c0, %c0_1] : memref<16x16xf32, #tpu.memory_space<vmem>>, vector<16x16xf32>
    %c0_2 = arith.constant 0 : index
    %c0_3 = arith.constant 0 : index
    %4 = vector.load %arg3[%c0_2, %c0_3] : memref<16x32xf32, #tpu.memory_space<vmem>>, vector<16x32xf32>
    %c0_4 = arith.constant 0 : index
    %c0_5 = arith.constant 0 : index
    %5 = vector.load %arg4[%c0_4, %c0_5] : memref<32x16xf32, #tpu.memory_space<vmem>>, vector<32x16xf32>
    %cst = arith.constant dense<0.000000e+00> : vector<16x16xf32>
    %6 = tpu.matmul %4, %5, %cst {dimension_numbers = #tpu.dot_dimension_numbers<[1], [0], [0], [1], [0, 0, 1, 1], [], []>} : vector<16x32xf32>, vector<32x16xf32>, vector<16x16xf32> -> vector<16x16xf32>
    %7 = arith.addf %3, %6 : vector<16x16xf32>
    %c0_6 = arith.constant 0 : index
    %c0_7 = arith.constant 0 : index
    %8 = vector.load %arg7[%c0_6, %c0_7] : memref<16x16xf32, #tpu.memory_space<vmem>>, vector<16x16xf32>
    tpu.vector_store %arg7[%c0_6, %c0_7], %7 {strides = array<i32>} : memref<16x16xf32, #tpu.memory_space<vmem>>, vector<16x16xf32>,
    %c0_i32_8 = arith.constant 0 : i32
    %9 = arith.cmpi eq, %arg2, %c0_i32_8 : i32
    %10 = arith.extui %9 : i1 to i32
    %c0_i32_9 = arith.constant 0 : i32
    %11 = arith.cmpi ne, %10, %c0_i32_9 : i32
    scf.if %11 {
      %c0_10 = arith.constant 0 : index
      %c0_11 = arith.constant 0 : index
      %12 = vector.load %arg7[%c0_10, %c0_11] : memref<16x16xf32, #tpu.memory_space<vmem>>, vector<16x16xf32>
      %c0_12 = arith.constant 0 : index
      %c0_13 = arith.constant 0 : index
      %13 = vector.load %arg5[%c0_12, %c0_13] : memref<1x16xf32, #tpu.memory_space<vmem>>, vector<1x16xf32>
      %14 = vector.broadcast %13 : vector<1x16xf32> to vector<16x16xf32>
      %15 = arith.addf %12, %14 : vector<16x16xf32>
      %c0_14 = arith.constant 0 : index
      %c0_15 = arith.constant 0 : index
      %16 = vector.load %arg6[%c0_14, %c0_15] : memref<16x16xf32, #tpu.memory_space<vmem>>, vector<16x16xf32>
      tpu.vector_store %arg6[%c0_14, %c0_15], %15 {strides = array<i32>} : memref<16x16xf32, #tpu.memory_space<vmem>>, vector<16x16xf32>,
    } else {
    }
    return
  }
  func.func @transform_0(%arg0: i32, %arg1: i32, %arg2: i32) -> (i32, i32) {
    %c0_i32 = arith.constant 0 : i32
    return %arg0, %arg2 : i32, i32
  }
  func.func @transform_1(%arg0: i32, %arg1: i32, %arg2: i32) -> (i32, i32) {
    %c0_i32 = arith.constant 0 : i32
    return %arg2, %arg1 : i32, i32
  }
  func.func @transform_2(%arg0: i32, %arg1: i32, %arg2: i32) -> (i32, i32) {
    %c0_i32 = arith.constant 0 : i32
    %c0_i32_0 = arith.constant 0 : i32
    return %c0_i32, %arg1 : i32, i32
  }
  func.func @transform_3(%arg0: i32, %arg1: i32, %arg2: i32) -> (i32, i32) {
    %c0_i32 = arith.constant 0 : i32
    return %arg0, %arg1 : i32, i32
  }
}

</mosaic_0001>

<llo_original>
// kernel: numerical_out.1
$region0: #{numerical_out.1}
  #allocation0 [shape = 'u32[]', space=smem, size = 0x4, offset = 0x4, fixed_abs, tag = 'smem constant byte address 0x4 - core index']
  #allocation1 [shape = 'u32[144,128]{1,0:T(1,128)}', space=vmem, size = 0x12000, scoped, tag = 'internal scratch']
  #allocation2 [shape = 'f32[16,16]{1,0:T(8,128)}', space=vmem, size = 0x2000, scoped, tag = 'scratch operand']
  %s0 = inlined_call_operand.vmem [shape: f32[16,32], index: 0, kind: input, shape index: {}]
  %s1 = inlined_call_operand.vmem [shape: f32[32,16], index: 1, kind: input, shape index: {}]
  %s2 = inlined_call_operand.vmem [shape: f32[1,16], index: 2, kind: input, shape index: {}]
  %s3 = inlined_call_operand.hbm [shape: f32[16,16], index: 3, kind: output, shape index: {}]
  %s4 = sld [smem:[#allocation0]]
  $region30: #{numerical_out.1} parent=0
    _
  %s6 = ssub.s32 1, %s4
  %s7 = scalar_select 0, %s6, %s4
  $region1: #{numerical_out.1} parent=0
    #allocation3 [shape = 'u8[8192]{0}', space=vmem, size = 0x2000, scoped, tag = 'output window, operand 0, single buffered']
    #allocation4 [shape = 's32[1]{0}', space=sflag, size = 0x4, scoped, tag = 'scoped memory for numerical_out.1']
    %8 = vsyncpa [#allocation4], 0
    // Predicated region
    $region2: #{numerical_out.1} parent=1 // pred_check
      _
    $region3: #{numerical_out.1} parent=1 // pred_check_branch
      %10 = sbr.rel (0) target = $region5
    $region4: #{numerical_out.1} parent=1 // pred_region
      _
    $region5: #{numerical_out.1} parent=1 // pred_fallthru
      _
    // Predicated region
    $region6: #{numerical_out.1} parent=1 // pred_check
      _
    $region7: #{numerical_out.1} parent=1 // pred_check_branch
      %12 = sbr.rel (0) target = $region9
    $region8: #{numerical_out.1} parent=1 // pred_region
      _
    $region9: #{numerical_out.1} parent=1 // pred_fallthru
      _
    // Predicated region
    $region10: #{numerical_out.1} parent=1 // pred_check
      _
    $region11: #{numerical_out.1} parent=1 // pred_check_branch
      %14 = sbr.rel (0) target = $region13
    $region12: #{numerical_out.1} parent=1 // pred_region
      _
    $region13: #{numerical_out.1} parent=1 // pred_fallthru
      _
    %p15 = scmp.eq.s32.totalorder 0, 0
    // Predicated region
    $region14: #{numerical_out.1} parent=1 // pred_check
      %p16 = pneg %p15
    $region15: #{numerical_out.1} parent=1 // pred_check_branch
      %18 = sbr.rel (%p16) target = $region17
    $region16: #{numerical_out.1} parent=1 // pred_region
      %vm19 = vcmask 130048
      %20 = vst.msk [vmem:[#allocation2] sm:$0xff] %vm19, 0.0
      %21 = vst.msk [vmem:[#allocation2 + $0x8] sm:$0xff] %vm19, 0.0
    $region17: #{numerical_out.1} parent=1 // pred_fallthru
      _
    %v22 = vld [vmem:[#allocation2] sm:$0xff]
    %v23 = vld [vmem:[#allocation2 + $0x8] sm:$0xff]
    %v24 = vld [vmem:[%s0] sm:$0xff]
    %v25 = vld [vmem:[%s0 + $0x8] sm:$0xff]
    %v26 = vld [vmem:[%s1] sm:$0xff]
    %v27 = vld [vmem:[%s1 + $0x8] sm:$0xff]
    %v28 = vld [vmem:[%s1 + $0x10] sm:$0xff]
    %v29 = vld [vmem:[%s1 + $0x18] sm:$0xff]
    %vm30 = vcmask 261120
    %v32 = vsel %vm30, %v24, 0
    %v35 = vsel %vm30, %v25, 0
    %37 = vmatprep.subr.mxu0 0.0
    %38 = vmatpush1.msra.mxu0 %v26
    %39 = vmatprep.subr.mxu0 0.0
    %40 = vmatpush1.msra.mxu0 %v27
    %41 = vmatprep.subr.mxu0 0.0
    %42 = vmatpush1.msra.mxu0 %v28
    %43 = vmatprep.subr.mxu0 0.0
    %44 = vmatpush1.msra.mxu0 %v29
    %45 = vmatprep.subr.mxu0 0.0
    %46 = vmatpush1.msra.mxu0 0.0
    %47 = vmatprep.subr.mxu0 0.0
    %48 = vmatpush1.msra.mxu0 0.0
    %49 = vmatprep.subr.mxu0 0.0
    %50 = vmatpush1.msra.mxu0 0.0
    %51 = vmatprep.subr.mxu0 0.0
    %52 = vmatpush1.msra.mxu0 0.0
    %53 = vmatprep.subr.mxu0 0.0
    %54 = vmatpush1.msra.mxu0 0.0
    %55 = vmatprep.subr.mxu0 0.0
    %56 = vmatpush1.msra.mxu0 0.0
    %57 = vmatprep.subr.mxu0 0.0
    %58 = vmatpush1.msra.mxu0 0.0
    %59 = vmatprep.subr.mxu0 0.0
    %60 = vmatpush1.msra.mxu0 0.0
    %61 = vmatprep.subr.mxu0 0.0
    %62 = vmatpush1.msra.mxu0 0.0
    %63 = vmatprep.subr.mxu0 0.0
    %64 = vmatpush1.msra.mxu0 0.0
    %65 = vmatprep.subr.mxu0 0.0
    %66 = vmatpush1.msra.mxu0 0.0
    %67 = vmatprep.subr.mxu0 0.0
    %68 = vmatpush1.msra.mxu0 0.0
    %69 = vmatprep.subr.mxu0 0.0
    %70 = vmatpush1.msra.mxu0 0.0
    %71 = vmatprep.subr.mxu0 0.0
    %72 = vmatpush1.msra.mxu0 0.0
    %73 = vmatprep.subr.mxu0 0.0
    %74 = vmatpush1.msra.mxu0 0.0
    %75 = vmatprep.subr.mxu0 0.0
    %76 = vmatpush1.msra.mxu0 0.0
    %77 = vmatprep.subr.mxu0 0.0
    %78 = vmatpush1.msra.mxu0 0.0
    %79 = vmatprep.subr.mxu0 0.0
    %80 = vmatpush1.msra.mxu0 0.0
    %81 = vmatprep.subr.mxu0 0.0
    %82 = vmatpush1.msra.mxu0 0.0
    %83 = vmatprep.subr.mxu0 0.0
    %84 = vmatpush1.msra.mxu0 0.0
    %85 = vmatprep.subr.mxu0 0.0
    %86 = vmatpush1.msra.mxu0 0.0
    %87 = vmatprep.subr.mxu0 0.0
    %88 = vmatpush1.msra.mxu0 0.0
    %89 = vmatprep.subr.mxu0 0.0
    %90 = vmatpush1.msra.mxu0 0.0
    %91 = vmatprep.subr.mxu0 0.0
    %92 = vmatpush1.msra.mxu0 0.0
    %93 = vmatprep.subr.mxu0 0.0
    %94 = vmatpush1.msra.mxu0 0.0
    %95 = vmatprep.subr.mxu0 0.0
    %96 = vmatpush1.msra.mxu0 0.0
    %97 = vmatprep.subr.mxu0 0.0
    %98 = vmatpush1.msra.mxu0 0.0
    %99 = vmatprep.subr.mxu0 0.0
    %100 = vmatpush1.msra.mxu0 0.0
    %101 = vmatprep.mubr.f32.mxu0 0.0
    %102 = vmatmul.mubr.f32.gmra.mrb[0].mxu0 %v32
    %v103 = vpop.f32.mrb[0].mxu0
    %v104 = vadd.f32 0.0, %v103
    %v105 = vpop.f32.mrb[0].mxu0
    %106 = vmatprep.mubr.f32.mxu0 0.0
    %107 = vmatmul.mubr.f32.gmra.mrb[0].mxu0 %v35
    %v108 = vpop.f32.mrb[0].mxu0
    %v109 = vadd.f32 0.0, %v108
    %v110 = vpop.f32.mrb[0].mxu0
    %111 = vdwg.mxu0
    %v112 = vadd.f32 %v22, %v104
    %v113 = vadd.f32 %v23, %v109
    %vm114 = vcmask 130048
    %115 = vst.msk [vmem:[#allocation2] sm:$0xff] %vm114, %v112
    %116 = vst.msk [vmem:[#allocation2 + $0x8] sm:$0xff] %vm114, %v113
    // Predicated region
    $region18: #{numerical_out.1} parent=1 // pred_check
      %p117 = pneg %p15
    $region19: #{numerical_out.1} parent=1 // pred_check_branch
      %119 = sbr.rel (%p117) target = $region21
    $region20: #{numerical_out.1} parent=1 // pred_region
      %v120 = vld [vmem:[#allocation2] sm:$0xff]
      %v121 = vld [vmem:[#allocation2 + $0x8] sm:$0xff]
      %v122 = vld [vmem:[%s2] sm:$0x1]
      %v124 = vlaneseq
      %v125 = vshrl.u32 %v124, 7
      %v126 = vsub.s32 0, %v125
      %v127 = vrot.slane %v122, %v126
      %v129 = vadd.f32 %v120, %v127
      %v130 = vadd.f32 %v121, %v127
      %131 = vst.msk [vmem:[#allocation3] sm:$0xff] %vm114, %v129
      %132 = vst.msk [vmem:[#allocation3 + $0x8] sm:$0xff] %vm114, %v130
    $region21: #{numerical_out.1} parent=1 // pred_fallthru
      _
    // Predicated region
    $region22: #{numerical_out.1} parent=1 // pred_check
      _
    $region23: #{numerical_out.1} parent=1 // pred_check_branch
      %134 = sbr.rel (0) target = $region25
    $region24: #{numerical_out.1} parent=1 // pred_region
      %s136 = ssub.s32 256, 256
      %137 = vsyncadd [#allocation4], %s136
      %s138 = sshll.u32 [#allocation3], 4
      %s139 = int_to_ptr.vmem [resolvable:$true] %s138
      %144 = dma.vmem_to_hbm [thread:$0]  %s139, 256, %s3, [#allocation4], 128, 128, 8
    $region25: #{numerical_out.1} parent=1 // pred_fallthru
      _
    // Predicated region
    $region26: #{numerical_out.1} parent=1 // pred_check
      _
    $region27: #{numerical_out.1} parent=1 // pred_check_branch
      %146 = sbr.rel (0) target = $region29
    $region28: #{numerical_out.1} parent=1 // pred_region
      %147 = dma.done [#allocation4], 256
    $region29: #{numerical_out.1} parent=1 // pred_fallthru
      _
    %148 = vsyncpa [#allocation4], 1

</llo_original>
